<compile_context>
chip_gen: v7x
topology: tpu7x:2x2x1
jax: 0.10.0
libtpu: 0.0.40
codegen_flags: <defaults>
</compile_context>

<pallas_src>
import functools

import jax
import jax.numpy as jnp
from jax import lax
from jax.experimental import pallas as pl
from jax.experimental.pallas import tpu as pltpu


_LANE = 1024            # lane-dense last dim of the 2D slab (multiple of 128)
_MAX_BLOCK_ROWS = 512   # (512, 1024) f32 = 2 MiB/block; x (in+out) x doublebuf = 8 MiB


def _hash_u32(x):
    """lowbias32 integer hash (good avalanche); pure VPU integer ops."""
    x = x ^ (x >> 16)
    x = x * jnp.uint32(0x7FEB352D)
    x = x ^ (x >> 15)
    x = x * jnp.uint32(0x846CA68B)
    x = x ^ (x >> 16)
    return x


def _gaussian_noise_kernel(seed_ref, x_ref, o_ref, *, mean, std, block_rows, lane):
    half = lane // 2

    # Globally-unique per-pair counter: the row index includes the grid
    # position, so every tile gets independent noise for a given seed
    # (this addresses the "same seed every grid step" correctness concern).
    pid = pl.program_id(0).astype(jnp.uint32)
    row = lax.broadcasted_iota(jnp.uint32, (block_rows, half), 0)
    col = lax.broadcasted_iota(jnp.uint32, (block_rows, half), 1)
    grow = pid * jnp.uint32(block_rows) + row
    ctr = grow * jnp.uint32(half) + col

    seed = seed_ref[0].astype(jnp.uint32)
    key = ctr * jnp.uint32(2) + seed
    bits1 = _hash_u32(key)
    bits2 = _hash_u32(key + jnp.uint32(1))

    # Top 24 bits -> uniforms. u1 in (0, 1] (avoids log(0)), u2 in [0, 1).
    inv_2_24 = jnp.float32(1.0 / 16777216.0)
    u1 = ((bits1 >> 8) + jnp.uint32(1)).astype(jnp.int32).astype(jnp.float32) * inv_2_24
    u2 = (bits2 >> 8).astype(jnp.int32).astype(jnp.float32) * inv_2_24

    # Box-Muller using BOTH outputs: one log+sqrt feeds two normals.
    r = jnp.sqrt(jnp.float32(-2.0) * jnp.log(u1))
    theta = jnp.float32(2.0 * 3.14159265358979323846) * u2
    z = jnp.concatenate([r * jnp.cos(theta), r * jnp.sin(theta)], axis=-1)

    noise = z * jnp.float32(std) + jnp.float32(mean)
    o_ref[...] = (x_ref[...].astype(jnp.float32) + noise).astype(o_ref.dtype)


def gaussian_noise(img, seed: int, mean: float = 0.0, std: float = 1.0):
    """out = img + (N(0, 1) * std + mean), elementwise; img of any shape, float dtype."""
    orig_shape = img.shape
    x = img.reshape(-1)
    n = x.shape[0]

    # Pad only to the next lane multiple (<= 1023 elements); skipped entirely
    # when the flat size already divides the lane width (no extra HBM pass).
    padded = ((n + _LANE - 1) // _LANE) * _LANE
    if padded != n:
        x = jnp.pad(x, (0, padded - n))
    rows = padded // _LANE
    x2d = x.reshape(rows, _LANE)

    # Full row dim when small (block == full array dim is always legal),
    # otherwise 512-row blocks (multiple of 8) with a masked partial tail.
    block_rows = rows if rows < _MAX_BLOCK_ROWS else _MAX_BLOCK_ROWS
    grid = (pl.cdiv(rows, block_rows),)

    seed_arr = jnp.asarray([seed], dtype=jnp.int32)

    out2d = pl.pallas_call(
        functools.partial(
            _gaussian_noise_kernel,
            mean=float(mean), std=float(std),
            block_rows=block_rows, lane=_LANE),
        out_shape=jax.ShapeDtypeStruct((rows, _LANE), img.dtype),
        grid=grid,
        in_specs=[
            pl.BlockSpec(memory_space=pltpu.MemorySpace.SMEM),    # seed scalar
            pl.BlockSpec((block_rows, _LANE), lambda i: (i, 0)),  # image tile
        ],
        out_specs=pl.BlockSpec((block_rows, _LANE), lambda i: (i, 0)),
        compiler_params=pltpu.CompilerParams(
            dimension_semantics=("parallel",)),
    )(seed_arr, x2d)

    out = out2d.reshape(-1)
    if padded != n:
        out = out[:n]
    return out.reshape(orig_shape)


if __name__ == "__main__":
    key = jax.random.PRNGKey(0)
    # NCHW, as in PyTorch conv-style image tensors.
    img = jax.random.normal(key, (2, 4, 16, 16), dtype=jnp.float32)

    mean, std = 0.5, 2.0
    out = gaussian_noise(img, seed=1234, mean=mean, std=std)
    out = jax.block_until_ready(out)

    # Sanity: shape/dtype preserved; noise statistics roughly match N(mean, std^2).
    assert out.shape == img.shape and out.dtype == img.dtype
    noise = out - img
    emp_mean = float(jnp.mean(noise))
    emp_std = float(jnp.std(noise))
    assert abs(emp_mean - mean) < 0.3, emp_mean
    assert abs(emp_std - std) < 0.3, emp_std

    print("KERNEL_OK")
</pallas_src>

<mosaic_0001>
module attributes {stable_mosaic.version = 11 : i64} {
  func.func @_gaussian_noise_kernel(%arg0: i32, %arg1: memref<1xi32, #tpu.memory_space<smem>>, %arg2: memref<2x1024xf32, #tpu.memory_space<vmem>>, %arg3: memref<2x1024xf32, #tpu.memory_space<vmem>>) attributes {dimension_semantics = [#tpu.dimension_semantics<parallel>], iteration_bounds = array<i64: 1>, scalar_prefetch = 0 : i64, scratch_operands = 0 : i64, tpu.core_type = #tpu.core_type<tc>, window_params = [{transform_indices = @transform_0, window_bounds = array<i64: 1>}, {transform_indices = @transform_1, window_bounds = array<i64: 2, 1024>}, {transform_indices = @transform_2, window_bounds = array<i64: 2, 1024>}]} {
    %0 = tpu.iota {dimensions = array<i32: 0>} : vector<2x512xi32>
    %1 = tpu.iota {dimensions = array<i32: 1>} : vector<2x512xi32>
    %c2_i32 = arith.constant 2 : i32
    %2 = arith.muli %arg0, %c2_i32 : i32
    %3 = vector.broadcast %2 : i32 to vector<2x512xi32>
    %4 = arith.addi %3, %0 : vector<2x512xi32>
    %c512_i32 = arith.constant 512 : i32
    %5 = vector.broadcast %c512_i32 : i32 to vector<2x512xi32>
    %6 = arith.muli %4, %5 : vector<2x512xi32>
    %7 = arith.addi %6, %1 : vector<2x512xi32>
    %c0 = arith.constant 0 : index
    %8 = memref.load %arg1[%c0] : memref<1xi32, #tpu.memory_space<smem>>
    %c2_i32_0 = arith.constant 2 : i32
    %9 = vector.broadcast %c2_i32_0 : i32 to vector<2x512xi32>
    %10 = arith.muli %7, %9 : vector<2x512xi32>
    %11 = vector.broadcast %8 : i32 to vector<2x512xi32>
    %12 = arith.addi %10, %11 : vector<2x512xi32>
    %c16_i32 = arith.constant 16 : i32
    %13 = vector.broadcast %c16_i32 : i32 to vector<2x512xi32>
    %14 = arith.shrui %12, %13 : vector<2x512xi32>
    %15 = arith.xori %12, %14 : vector<2x512xi32>
    %c2146121005_i32 = arith.constant 2146121005 : i32
    %16 = vector.broadcast %c2146121005_i32 : i32 to vector<2x512xi32>
    %17 = arith.muli %15, %16 : vector<2x512xi32>
    %c15_i32 = arith.constant 15 : i32
    %18 = vector.broadcast %c15_i32 : i32 to vector<2x512xi32>
    %19 = arith.shrui %17, %18 : vector<2x512xi32>
    %20 = arith.xori %17, %19 : vector<2x512xi32>
    %c-2073254261_i32 = arith.constant -2073254261 : i32
    %21 = vector.broadcast %c-2073254261_i32 : i32 to vector<2x512xi32>
    %22 = arith.muli %20, %21 : vector<2x512xi32>
    %c16_i32_1 = arith.constant 16 : i32
    %23 = vector.broadcast %c16_i32_1 : i32 to vector<2x512xi32>
    %24 = arith.shrui %22, %23 : vector<2x512xi32>
    %25 = arith.xori %22, %24 : vector<2x512xi32>
    %c1_i32 = arith.constant 1 : i32
    %26 = vector.broadcast %c1_i32 : i32 to vector<2x512xi32>
    %27 = arith.addi %12, %26 : vector<2x512xi32>
    %c16_i32_2 = arith.constant 16 : i32
    %28 = vector.broadcast %c16_i32_2 : i32 to vector<2x512xi32>
    %29 = arith.shrui %27, %28 : vector<2x512xi32>
    %30 = arith.xori %27, %29 : vector<2x512xi32>
    %c2146121005_i32_3 = arith.constant 2146121005 : i32
    %31 = vector.broadcast %c2146121005_i32_3 : i32 to vector<2x512xi32>
    %32 = arith.muli %30, %31 : vector<2x512xi32>
    %c15_i32_4 = arith.constant 15 : i32
    %33 = vector.broadcast %c15_i32_4 : i32 to vector<2x512xi32>
    %34 = arith.shrui %32, %33 : vector<2x512xi32>
    %35 = arith.xori %32, %34 : vector<2x512xi32>
    %c-2073254261_i32_5 = arith.constant -2073254261 : i32
    %36 = vector.broadcast %c-2073254261_i32_5 : i32 to vector<2x512xi32>
    %37 = arith.muli %35, %36 : vector<2x512xi32>
    %c16_i32_6 = arith.constant 16 : i32
    %38 = vector.broadcast %c16_i32_6 : i32 to vector<2x512xi32>
    %39 = arith.shrui %37, %38 : vector<2x512xi32>
    %40 = arith.xori %37, %39 : vector<2x512xi32>
    %c8_i32 = arith.constant 8 : i32
    %41 = vector.broadcast %c8_i32 : i32 to vector<2x512xi32>
    %42 = arith.shrui %25, %41 : vector<2x512xi32>
    %c1_i32_7 = arith.constant 1 : i32
    %43 = vector.broadcast %c1_i32_7 : i32 to vector<2x512xi32>
    %44 = arith.addi %42, %43 : vector<2x512xi32>
    %45 = arith.sitofp %44 : vector<2x512xi32> to vector<2x512xf32>
    %cst = arith.constant 5.96046448E-8 : f32
    %46 = vector.broadcast %cst : f32 to vector<2x512xf32>
    %47 = arith.mulf %45, %46 : vector<2x512xf32>
    %c8_i32_8 = arith.constant 8 : i32
    %48 = vector.broadcast %c8_i32_8 : i32 to vector<2x512xi32>
    %49 = arith.shrui %40, %48 : vector<2x512xi32>
    %50 = arith.sitofp %49 : vector<2x512xi32> to vector<2x512xf32>
    %cst_9 = arith.constant 5.96046448E-8 : f32
    %51 = vector.broadcast %cst_9 : f32 to vector<2x512xf32>
    %52 = arith.mulf %50, %51 : vector<2x512xf32>
    %53 = math.log %47 : vector<2x512xf32>
    %cst_10 = arith.constant -2.000000e+00 : f32
    %54 = vector.broadcast %cst_10 : f32 to vector<2x512xf32>
    %55 = arith.mulf %54, %53 : vector<2x512xf32>
    %56 = math.sqrt %55 : vector<2x512xf32>
    %cst_11 = arith.constant 6.28318548 : f32
    %57 = vector.broadcast %cst_11 : f32 to vector<2x512xf32>
    %58 = arith.mulf %57, %52 : vector<2x512xf32>
    %59 = math.cos %58 : vector<2x512xf32>
    %60 = arith.mulf %56, %59 : vector<2x512xf32>
    %61 = math.sin %58 : vector<2x512xf32>
    %62 = arith.mulf %56, %61 : vector<2x512xf32>
    %63 = tpu.concatenate %60, %62 in 1 : vector<2x512xf32>, vector<2x512xf32> -> vector<2x1024xf32>
    %cst_12 = arith.constant 2.000000e+00 : f32
    %64 = vector.broadcast %cst_12 : f32 to vector<2x1024xf32>
    %65 = arith.mulf %63, %64 : vector<2x1024xf32>
    %cst_13 = arith.constant 5.000000e-01 : f32
    %66 = vector.broadcast %cst_13 : f32 to vector<2x1024xf32>
    %67 = arith.addf %65, %66 : vector<2x1024xf32>
    %c0_14 = arith.constant 0 : index
    %c0_15 = arith.constant 0 : index
    %68 = vector.load %arg2[%c0_14, %c0_15] : memref<2x1024xf32, #tpu.memory_space<vmem>>, vector<2x1024xf32>
    %69 = arith.addf %68, %67 : vector<2x1024xf32>
    %c0_16 = arith.constant 0 : index
    %c0_17 = arith.constant 0 : index
    %70 = vector.load %arg3[%c0_16, %c0_17] : memref<2x1024xf32, #tpu.memory_space<vmem>>, vector<2x1024xf32>
    tpu.vector_store %arg3[%c0_16, %c0_17], %69 {strides = array<i32>} : memref<2x1024xf32, #tpu.memory_space<vmem>>, vector<2x1024xf32>,
    return
  }
  func.func @transform_0(%arg0: i32) -> i32 {
    %c0_i32 = arith.constant 0 : i32
    %c0_i32_0 = arith.constant 0 : i32
    return %c0_i32 : i32
  }
  func.func @transform_1(%arg0: i32) -> (i32, i32) {
    %c0_i32 = arith.constant 0 : i32
    %c0_i32_0 = arith.constant 0 : i32
    return %arg0, %c0_i32 : i32, i32
  }
  func.func @transform_2(%arg0: i32) -> (i32, i32) {
    %c0_i32 = arith.constant 0 : i32
    %c0_i32_0 = arith.constant 0 : i32
    return %arg0, %c0_i32 : i32, i32
  }
}

</mosaic_0001>

<llo_original>
// kernel: tpu_custom_call.1
$region0: #{tpu_custom_call.1}
  #allocation0 [shape = 'u32[]', space=smem, size = 0x4, offset = 0x4, fixed_abs, tag = 'smem constant byte address 0x4 - core index']
  #allocation1 [shape = 'u32[144,128]{1,0:T(1,128)}', space=vmem, size = 0x12000, scoped, tag = 'internal scratch']
  #allocation2 [shape = 's32[1]{0:T(128)S(6)}', space=smem, size = 0x200, scoped, tag = 'scoped memory for tpu_custom_call.1']
  %s0 = inlined_call_operand.<no memory space> [shape: s32[1], index: 0, kind: input, shape index: {}]
  %s1 = inlined_call_operand.hbm [shape: f32[2,1024], index: 1, kind: input, shape index: {}]
  %s2 = inlined_call_operand.hbm [shape: f32[2,1024], index: 2, kind: output, shape index: {}]
  %s3 = sld [smem:[#allocation0]]
  $region22: #{tpu_custom_call.1} parent=0
    _
  %s5 = ssub.s32 1, %s3
  %s6 = scalar_select 0, %s5, %s3
  %7 = sst [smem:[#allocation2]] %s0
  $region1: #{tpu_custom_call.1} parent=0
    #allocation3 [shape = 'u8[8192]{0}', space=vmem, size = 0x2000, scoped, tag = 'input window, operand 1, single buffered']
    #allocation4 [shape = 's32[1]{0}', space=sflag, size = 0x4, scoped, tag = 'scoped memory for tpu_custom_call.1']
    #allocation5 [shape = 's32[1]{0}', space=sflag, size = 0x4, scoped, tag = 'scoped memory for tpu_custom_call.1']
    #allocation6 [shape = 'u8[8192]{0}', space=vmem, size = 0x2000, scoped, tag = 'output window, operand 0, single buffered']
    %8 = vsyncpa [#allocation4], 0
    %9 = vsyncpa [#allocation5], 0
    // Predicated region
    $region2: #{tpu_custom_call.1} parent=1 // pred_check
      _
    $region3: #{tpu_custom_call.1} parent=1 // pred_check_branch
      %11 = sbr.rel (0) target = $region5
    $region4: #{tpu_custom_call.1} parent=1 // pred_region
      _
    $region5: #{tpu_custom_call.1} parent=1 // pred_fallthru
      _
    // Predicated region
    $region6: #{tpu_custom_call.1} parent=1 // pred_check
      _
    $region7: #{tpu_custom_call.1} parent=1 // pred_check_branch
      %13 = sbr.rel (0) target = $region9
    $region8: #{tpu_custom_call.1} parent=1 // pred_region
      %s15 = ssub.s32 256, 256
      %16 = vsyncadd [#allocation4], %s15
      %s18 = sshll.u32 [#allocation3], 4
      %s19 = int_to_ptr.vmem [resolvable:$true] %s18
      %21 = dma.hbm_to_vmem [thread:$0]  %s1, 256, %s19, [#allocation4]
    $region9: #{tpu_custom_call.1} parent=1 // pred_fallthru
      _
    // Predicated region
    $region10: #{tpu_custom_call.1} parent=1 // pred_check
      _
    $region11: #{tpu_custom_call.1} parent=1 // pred_check_branch
      %23 = sbr.rel (0) target = $region13
    $region12: #{tpu_custom_call.1} parent=1 // pred_region
      %24 = dma.done [#allocation4], 256
    $region13: #{tpu_custom_call.1} parent=1 // pred_fallthru
      _
    %v25 = vlaneseq
    %v26 = vshrl.u32 %v25, 7
    %v27 = vlaneseq
    %v28 = vand.u32 %v27, 127
    %v29 = vadd.s32 %v28, 128
    %v30 = vadd.s32 %v28, 256
    %v31 = vadd.s32 %v28, 384
    %s32 = smul.u32 0, 2
    %v33 = vstv %s32
    %v34 = vadd.s32 %v33, %v26
    %v35 = vmul.u32 %v34, 512
    %v36 = vadd.s32 %v35, %v28
    %v37 = vadd.s32 %v35, %v29
    %v38 = vadd.s32 %v35, %v30
    %v39 = vadd.s32 %v35, %v31
    %s40 = sld [smem:[#allocation2]]
    %v41 = vmul.u32 %v36, 2
    %v42 = vmul.u32 %v37, 2
    %v43 = vmul.u32 %v38, 2
    %v44 = vmul.u32 %v39, 2
    %v45 = vstv %s40
    %v46 = vadd.s32 %v41, %v45
    %v47 = vadd.s32 %v42, %v45
    %v48 = vadd.s32 %v43, %v45
    %v49 = vadd.s32 %v44, %v45
    %v50 = vshrl.u32 %v46, 16
    %v51 = vshrl.u32 %v47, 16
    %v52 = vshrl.u32 %v48, 16
    %v53 = vshrl.u32 %v49, 16
    %v54 = vxor.u32 %v46, %v50
    %v55 = vxor.u32 %v47, %v51
    %v56 = vxor.u32 %v48, %v52
    %v57 = vxor.u32 %v49, %v53
    %v58 = vmul.u32 %v54, 2146121005
    %v59 = vmul.u32 %v55, 2146121005
    %v60 = vmul.u32 %v56, 2146121005
    %v61 = vmul.u32 %v57, 2146121005
    %v62 = vshrl.u32 %v58, 15
    %v63 = vshrl.u32 %v59, 15
    %v64 = vshrl.u32 %v60, 15
    %v65 = vshrl.u32 %v61, 15
    %v66 = vxor.u32 %v58, %v62
    %v67 = vxor.u32 %v59, %v63
    %v68 = vxor.u32 %v60, %v64
    %v69 = vxor.u32 %v61, %v65
    %v70 = vmul.u32 %v66, 2221713035
    %v71 = vmul.u32 %v67, 2221713035
    %v72 = vmul.u32 %v68, 2221713035
    %v73 = vmul.u32 %v69, 2221713035
    %v74 = vshrl.u32 %v70, 16
    %v75 = vshrl.u32 %v71, 16
    %v76 = vshrl.u32 %v72, 16
    %v77 = vshrl.u32 %v73, 16
    %v78 = vxor.u32 %v70, %v74
    %v79 = vxor.u32 %v71, %v75
    %v80 = vxor.u32 %v72, %v76
    %v81 = vxor.u32 %v73, %v77
    %v82 = vadd.s32 %v46, 1
    %v83 = vadd.s32 %v47, 1
    %v84 = vadd.s32 %v48, 1
    %v85 = vadd.s32 %v49, 1
    %v86 = vshrl.u32 %v82, 16
    %v87 = vshrl.u32 %v83, 16
    %v88 = vshrl.u32 %v84, 16
    %v89 = vshrl.u32 %v85, 16
    %v90 = vxor.u32 %v82, %v86
    %v91 = vxor.u32 %v83, %v87
    %v92 = vxor.u32 %v84, %v88
    %v93 = vxor.u32 %v85, %v89
    %v94 = vmul.u32 %v90, 2146121005
    %v95 = vmul.u32 %v91, 2146121005
    %v96 = vmul.u32 %v92, 2146121005
    %v97 = vmul.u32 %v93, 2146121005
    %v98 = vshrl.u32 %v94, 15
    %v99 = vshrl.u32 %v95, 15
    %v100 = vshrl.u32 %v96, 15
    %v101 = vshrl.u32 %v97, 15
    %v102 = vxor.u32 %v94, %v98
    %v103 = vxor.u32 %v95, %v99
    %v104 = vxor.u32 %v96, %v100
    %v105 = vxor.u32 %v97, %v101
    %v106 = vmul.u32 %v102, 2221713035
    %v107 = vmul.u32 %v103, 2221713035
    %v108 = vmul.u32 %v104, 2221713035
    %v109 = vmul.u32 %v105, 2221713035
    %v110 = vshrl.u32 %v106, 16
    %v111 = vshrl.u32 %v107, 16
    %v112 = vshrl.u32 %v108, 16
    %v113 = vshrl.u32 %v109, 16
    %v114 = vxor.u32 %v106, %v110
    %v115 = vxor.u32 %v107, %v111
    %v116 = vxor.u32 %v108, %v112
    %v117 = vxor.u32 %v109, %v113
    %v118 = vshrl.u32 %v78, 8
    %v119 = vshrl.u32 %v79, 8
    %v120 = vshrl.u32 %v80, 8
    %v121 = vshrl.u32 %v81, 8
    %v122 = vadd.s32 %v118, 1
    %v123 = vadd.s32 %v119, 1
    %v124 = vadd.s32 %v120, 1
    %v125 = vadd.s32 %v121, 1
    %v126 = vcvt.s32.f32 %v122
    %v127 = vcvt.s32.f32 %v123
    %v128 = vcvt.s32.f32 %v124
    %v129 = vcvt.s32.f32 %v125
    %v130 = vmul.f32 %v126, 5.9604645e-08
    %v131 = vmul.f32 %v127, 5.9604645e-08
    %v132 = vmul.f32 %v128, 5.9604645e-08
    %v133 = vmul.f32 %v129, 5.9604645e-08
    %v134 = vshrl.u32 %v114, 8
    %v135 = vshrl.u32 %v115, 8
    %v136 = vshrl.u32 %v116, 8
    %v137 = vshrl.u32 %v117, 8
    %v138 = vcvt.s32.f32 %v134
    %v139 = vcvt.s32.f32 %v135
    %v140 = vcvt.s32.f32 %v136
    %v141 = vcvt.s32.f32 %v137
    %v142 = vmul.f32 %v138, 5.9604645e-08
    %v143 = vmul.f32 %v139, 5.9604645e-08
    %v144 = vmul.f32 %v140, 5.9604645e-08
    %v145 = vmul.f32 %v141, 5.9604645e-08
    %v146 = vlog2.pop %v130
    %v147 = vmul.f32 %v146, 0.6931472
    %v148 = vlog2.pop %v131
    %v149 = vmul.f32 %v148, 0.6931472
    %v150 = vlog2.pop %v132
    %v151 = vmul.f32 %v150, 0.6931472
    %v152 = vlog2.pop %v133
    %v153 = vmul.f32 %v152, 0.6931472
    %v154 = vmul.f32 %v147, -2.0
    %v155 = vmul.f32 %v149, -2.0
    %v156 = vmul.f32 %v151, -2.0
    %v157 = vmul.f32 %v153, -2.0
    %v158 = vrsqrt.pop %v154
    %v159 = vmul.f32 %v154, %v158
    %vm160 = vcmp.eq.f32.partialorder %v154, inf
    %v161 = vsel %vm160, %v154, %v159
    %vm162 = vcmp.eq.f32.partialorder %v154, 0.0
    %v163 = vand.u32 %v154, 2147483648
    %v164 = vsel %vm162, %v163, %v161
    %v165 = vrsqrt.pop %v155
    %v166 = vmul.f32 %v155, %v165
    %vm167 = vcmp.eq.f32.partialorder %v155, inf
    %v168 = vsel %vm167, %v155, %v166
    %vm169 = vcmp.eq.f32.partialorder %v155, 0.0
    %v170 = vand.u32 %v155, 2147483648
    %v171 = vsel %vm169, %v170, %v168
    %v172 = vrsqrt.pop %v156
    %v173 = vmul.f32 %v156, %v172
    %vm174 = vcmp.eq.f32.partialorder %v156, inf
    %v175 = vsel %vm174, %v156, %v173
    %vm176 = vcmp.eq.f32.partialorder %v156, 0.0
    %v177 = vand.u32 %v156, 2147483648
    %v178 = vsel %vm176, %v177, %v175
    %v179 = vrsqrt.pop %v157
    %v180 = vmul.f32 %v157, %v179
    %vm181 = vcmp.eq.f32.partialorder %v157, inf
    %v182 = vsel %vm181, %v157, %v180
    %vm183 = vcmp.eq.f32.partialorder %v157, 0.0
    %v184 = vand.u32 %v157, 2147483648
    %v185 = vsel %vm183, %v184, %v182
    %v186 = vmul.f32 %v142, 6.2831855
    %v187 = vmul.f32 %v143, 6.2831855
    %v188 = vmul.f32 %v144, 6.2831855
    %v189 = vmul.f32 %v145, 6.2831855
    %v190 = vand.u32 2147483647, %v186
    %vm191 = vcmp.le.f32.partialorder %v190, 0.7853982
    %vm192 = vcmp.lt.s32.totalorder %v186, 0
    %v193 = vand.u32 %v186, 2139095040
    %v194 = vshrl.u32 %v193, 23
    %v195 = vsub.s32 %v194, 127
    %v196 = vand.u32 2147483647, %v186
    %v197 = vand.u32 %v196, 8388607
    %v198 = vor.u32 %v197, 8388608
    %v199 = vsub.s32 0, %v198
    %v200 = vadd.s32 %v195, 1
    %vm201 = vcmp.gt.s32.totalorder %v200, 0
    %v202 = vsel %vm201, %v200, 0
    %v203 = vshrl.u32 %v202, 5
    %v204 = vand.u32 %v202, 31
    %v205 = vsub.s32 32, %v204
    %v206 = vshrl.u32 683565275, %v205
    %v207 = vshll.u32 683565275, %v204
    %v208 = vshrl.u32 2475754826, %v205
    %v209 = vor.u32 %v207, %v208
    %v210 = vshll.u32 2475754826, %v204
    %v211 = vshrl.u32 2131351028, %v205
    %v212 = vor.u32 %v210, %v211
    %v213 = vshll.u32 2131351028, %v204
    %v214 = vshrl.u32 2102212464, %v205
    %v215 = vor.u32 %v213, %v214
    %v216 = vshll.u32 2102212464, %v204
    %v217 = vshrl.u32 920167782, %v205
    %v218 = vor.u32 %v216, %v217
    %v219 = vshll.u32 920167782, %v204
    %v220 = vshrl.u32 1326507024, %v205
    %v221 = vor.u32 %v219, %v220
    %vm222 = vcmp.lt.s32.totalorder %v203, 1
    %vm223 = vcmp.lt.s32.totalorder %v203, 2
    %vm224 = vcmp.lt.s32.totalorder %v203, 3
    %vm225 = vcmp.lt.s32.totalorder %v203, 4
    %v226 = vsel %vm222, %v206, %v209
    %v227 = vsel %vm225, %v215, 2102212464
    %v228 = vsel %vm224, %v212, %v227
    %v229 = vsel %vm223, %v226, %v228
    %v230 = vsel %vm222, %v209, %v212
    %v231 = vsel %vm225, %v218, 920167782
    %v232 = vsel %vm224, %v215, %v231
    %v233 = vsel %vm223, %v230, %v232
    %v234 = vsel %vm222, %v212, %v215
    %v235 = vsel %vm225, %v221, 1326507024
    %v236 = vsel %vm224, %v218, %v235
    %v237 = vsel %vm223, %v234, %v236
    %v238 = vshll.u32 %v198, 8
    %v239 = vmul.u32.u64.compose %v238, %v237
    %v240 = vextract.low.u32 %v239
    %v241 = vextract.high.u32 %v239
    %v242 = vmul.u32.u64.compose %v238, %v233
    %v243 = vextract.low.u32 %v242
    %v244 = vextract.high.u32 %v242
    %v245 = vmul.u32 %v238, %v229
    %v246 = vadd.s32 %v241, %v243
    %vm247 = vc.u32 %v241, %v243
    %v248 = vadd.s32 %v244, 1
    %v249 = vsel %vm247, %v248, %v244
    %v250 = vadd.s32 %v245, %v249
    %v251 = vadd.s32 %v250, 536870912
    %v252 = vshrl.u32 %v251, 30
    %v253 = vshll.u32 %v252, 30
    %v254 = vsub.s32 %v250, %v253
    %vm255 = vcmp.lt.s32.totalorder %v254, 0
    %v256 = vsub.s32 0, %v254
    %v257 = vsel %vm255, %v256, %v254
    %v258 = vclz %v257
    %v259 = vsub.s32 %v258, 2
    %vm260 = vcmp.gt.s32.totalorder 0, %v259
    %v261 = vsel %vm260, 0, %v259
    %v262 = vsub.s32 32, %v261
    %v263 = vshll.u32 %v254, %v261
    %v264 = vshrl.u32 %v246, %v262
    %v265 = vor.u32 %v263, %v264
    %v266 = vsub.s32 4294967266, %v261
    %v267 = vadd.s32 %v266, 127
    %v268 = vshll.u32 %v267, 23
    %v269 = vor.u32 4788187, %v268
    %v270 = vand.u32 2147483647, %v269
    %v272 = vcvt.s32.f32 %v265
    %v273 = vmul.f32 %v272, %v270
    %v274 = vxor.u32 %v273, 2147483648
    %v275 = vsel %vm192, %v274, %v273
    %v276 = vsub.s32 4, %v252
    %v277 = vsel %vm192, %v276, %v252
    %v278 = vsel %vm191, %v186, %v275
    %v279 = vsel %vm191, 0, %v277
    %v280 = vcosq.f32.pop %v278
    %v281 = vsinq.f32.pop %v278
    %vm282 = vweird.f32 %v186
    %v283 = vand.u32 %v279, 3
    %vm284 = vcmp.lt.s32.totalorder %v283, 2
    %vm285 = vcmp.eq.s32.totalorder %v283, 0
    %v286 = vxor.u32 %v281, 2147483648
    %v287 = vsel %vm285, %v280, %v286
    %vm288 = vcmp.eq.s32.totalorder %v283, 2
    %v289 = vxor.u32 %v280, 2147483648
    %v290 = vsel %vm288, %v289, %v281
    %v291 = vsel %vm284, %v287, %v290
    %v292 = vsel %vm282, nan, %v291
    %v293 = vand.u32 2147483647, %v187
    %vm294 = vcmp.le.f32.partialorder %v293, 0.7853982
    %vm295 = vcmp.lt.s32.totalorder %v187, 0
    %v296 = vand.u32 %v187, 2139095040
    %v297 = vshrl.u32 %v296, 23
    %v298 = vsub.s32 %v297, 127
    %v299 = vand.u32 2147483647, %v187
    %v300 = vand.u32 %v299, 8388607
    %v301 = vor.u32 %v300, 8388608
    %v302 = vsub.s32 0, %v301
    %v303 = vadd.s32 %v298, 1
    %vm304 = vcmp.gt.s32.totalorder %v303, 0
    %v305 = vsel %vm304, %v303, 0
    %v306 = vshrl.u32 %v305, 5
    %v307 = vand.u32 %v305, 31
    %v308 = vsub.s32 32, %v307
    %v309 = vshrl.u32 683565275, %v308
    %v310 = vshll.u32 683565275, %v307
    %v311 = vshrl.u32 2475754826, %v308
    %v312 = vor.u32 %v310, %v311
    %v313 = vshll.u32 2475754826, %v307
    %v314 = vshrl.u32 2131351028, %v308
    %v315 = vor.u32 %v313, %v314
    %v316 = vshll.u32 2131351028, %v307
    %v317 = vshrl.u32 2102212464, %v308
    %v318 = vor.u32 %v316, %v317
    %v319 = vshll.u32 2102212464, %v307
    %v320 = vshrl.u32 920167782, %v308
    %v321 = vor.u32 %v319, %v320
    %v322 = vshll.u32 920167782, %v307
    %v323 = vshrl.u32 1326507024, %v308
    %v324 = vor.u32 %v322, %v323
    %vm325 = vcmp.lt.s32.totalorder %v306, 1
    %vm326 = vcmp.lt.s32.totalorder %v306, 2
    %vm327 = vcmp.lt.s32.totalorder %v306, 3
    %vm328 = vcmp.lt.s32.totalorder %v306, 4
    %v329 = vsel %vm325, %v309, %v312
    %v330 = vsel %vm328, %v318, 2102212464
    %v331 = vsel %vm327, %v315, %v330
    %v332 = vsel %vm326, %v329, %v331
    %v333 = vsel %vm325, %v312, %v315
    %v334 = vsel %vm328, %v321, 920167782
    %v335 = vsel %vm327, %v318, %v334
    %v336 = vsel %vm326, %v333, %v335
    %v337 = vsel %vm325, %v315, %v318
    %v338 = vsel %vm328, %v324, 1326507024
    %v339 = vsel %vm327, %v321, %v338
    %v340 = vsel %vm326, %v337, %v339
    %v341 = vshll.u32 %v301, 8
    %v342 = vmul.u32.u64.compose %v341, %v340
    %v343 = vextract.low.u32 %v342
    %v344 = vextract.high.u32 %v342
    %v345 = vmul.u32.u64.compose %v341, %v336
    %v346 = vextract.low.u32 %v345
    %v347 = vextract.high.u32 %v345
    %v348 = vmul.u32 %v341, %v332
    %v349 = vadd.s32 %v344, %v346
    %vm350 = vc.u32 %v344, %v346
    %v351 = vadd.s32 %v347, 1
    %v352 = vsel %vm350, %v351, %v347
    %v353 = vadd.s32 %v348, %v352
    %v354 = vadd.s32 %v353, 536870912
    %v355 = vshrl.u32 %v354, 30
    %v356 = vshll.u32 %v355, 30
    %v357 = vsub.s32 %v353, %v356
    %vm358 = vcmp.lt.s32.totalorder %v357, 0
    %v359 = vsub.s32 0, %v357
    %v360 = vsel %vm358, %v359, %v357
    %v361 = vclz %v360
    %v362 = vsub.s32 %v361, 2
    %vm363 = vcmp.gt.s32.totalorder 0, %v362
    %v364 = vsel %vm363, 0, %v362
    %v365 = vsub.s32 32, %v364
    %v366 = vshll.u32 %v357, %v364
    %v367 = vshrl.u32 %v349, %v365
    %v368 = vor.u32 %v366, %v367
    %v369 = vsub.s32 4294967266, %v364
    %v370 = vadd.s32 %v369, 127
    %v371 = vshll.u32 %v370, 23
    %v372 = vor.u32 4788187, %v371
    %v373 = vand.u32 2147483647, %v372
    %v375 = vcvt.s32.f32 %v368
    %v376 = vmul.f32 %v375, %v373
    %v377 = vxor.u32 %v376, 2147483648
    %v378 = vsel %vm295, %v377, %v376
    %v379 = vsub.s32 4, %v355
    %v380 = vsel %vm295, %v379, %v355
    %v381 = vsel %vm294, %v187, %v378
    %v382 = vsel %vm294, 0, %v380
    %v383 = vcosq.f32.pop %v381
    %v384 = vsinq.f32.pop %v381
    %vm385 = vweird.f32 %v187
    %v386 = vand.u32 %v382, 3
    %vm387 = vcmp.lt.s32.totalorder %v386, 2
    %vm388 = vcmp.eq.s32.totalorder %v386, 0
    %v389 = vxor.u32 %v384, 2147483648
    %v390 = vsel %vm388, %v383, %v389
    %vm391 = vcmp.eq.s32.totalorder %v386, 2
    %v392 = vxor.u32 %v383, 2147483648
    %v393 = vsel %vm391, %v392, %v384
    %v394 = vsel %vm387, %v390, %v393
    %v395 = vsel %vm385, nan, %v394
    %v396 = vand.u32 2147483647, %v188
    %vm397 = vcmp.le.f32.partialorder %v396, 0.7853982
    %vm398 = vcmp.lt.s32.totalorder %v188, 0
    %v399 = vand.u32 %v188, 2139095040
    %v400 = vshrl.u32 %v399, 23
    %v401 = vsub.s32 %v400, 127
    %v402 = vand.u32 2147483647, %v188
    %v403 = vand.u32 %v402, 8388607
    %v404 = vor.u32 %v403, 8388608
    %v405 = vsub.s32 0, %v404
    %v406 = vadd.s32 %v401, 1
    %vm407 = vcmp.gt.s32.totalorder %v406, 0
    %v408 = vsel %vm407, %v406, 0
    %v409 = vshrl.u32 %v408, 5
    %v410 = vand.u32 %v408, 31
    %v411 = vsub.s32 32, %v410
    %v412 = vshrl.u32 683565275, %v411
    %v413 = vshll.u32 683565275, %v410
    %v414 = vshrl.u32 2475754826, %v411
    %v415 = vor.u32 %v413, %v414
    %v416 = vshll.u32 2475754826, %v410
    %v417 = vshrl.u32 2131351028, %v411
    %v418 = vor.u32 %v416, %v417
    %v419 = vshll.u32 2131351028, %v410
    %v420 = vshrl.u32 2102212464, %v411
    %v421 = vor.u32 %v419, %v420
    %v422 = vshll.u32 2102212464, %v410
    %v423 = vshrl.u32 920167782, %v411
    %v424 = vor.u32 %v422, %v423
    %v425 = vshll.u32 920167782, %v410
    %v426 = vshrl.u32 1326507024, %v411
    %v427 = vor.u32 %v425, %v426
    %vm428 = vcmp.lt.s32.totalorder %v409, 1
    %vm429 = vcmp.lt.s32.totalorder %v409, 2
    %vm430 = vcmp.lt.s32.totalorder %v409, 3
    %vm431 = vcmp.lt.s32.totalorder %v409, 4
    %v432 = vsel %vm428, %v412, %v415
    %v433 = vsel %vm431, %v421, 2102212464
    %v434 = vsel %vm430, %v418, %v433
    %v435 = vsel %vm429, %v432, %v434
    %v436 = vsel %vm428, %v415, %v418
    %v437 = vsel %vm431, %v424, 920167782
    %v438 = vsel %vm430, %v421, %v437
    %v439 = vsel %vm429, %v436, %v438
    %v440 = vsel %vm428, %v418, %v421
    %v441 = vsel %vm431, %v427, 1326507024
    %v442 = vsel %vm430, %v424, %v441
    %v443 = vsel %vm429, %v440, %v442
    %v444 = vshll.u32 %v404, 8
    %v445 = vmul.u32.u64.compose %v444, %v443
    %v446 = vextract.low.u32 %v445
    %v447 = vextract.high.u32 %v445
    %v448 = vmul.u32.u64.compose %v444, %v439
    %v449 = vextract.low.u32 %v448
    %v450 = vextract.high.u32 %v448
    %v451 = vmul.u32 %v444, %v435
    %v452 = vadd.s32 %v447, %v449
    %vm453 = vc.u32 %v447, %v449
    %v454 = vadd.s32 %v450, 1
    %v455 = vsel %vm453, %v454, %v450
    %v456 = vadd.s32 %v451, %v455
    %v457 = vadd.s32 %v456, 536870912
    %v458 = vshrl.u32 %v457, 30
    %v459 = vshll.u32 %v458, 30
    %v460 = vsub.s32 %v456, %v459
    %vm461 = vcmp.lt.s32.totalorder %v460, 0
    %v462 = vsub.s32 0, %v460
    %v463 = vsel %vm461, %v462, %v460
    %v464 = vclz %v463
    %v465 = vsub.s32 %v464, 2
    %vm466 = vcmp.gt.s32.totalorder 0, %v465
    %v467 = vsel %vm466, 0, %v465
    %v468 = vsub.s32 32, %v467
    %v469 = vshll.u32 %v460, %v467
    %v470 = vshrl.u32 %v452, %v468
    %v471 = vor.u32 %v469, %v470
    %v472 = vsub.s32 4294967266, %v467
    %v473 = vadd.s32 %v472, 127
    %v474 = vshll.u32 %v473, 23
    %v475 = vor.u32 4788187, %v474
    %v476 = vand.u32 2147483647, %v475
    %v478 = vcvt.s32.f32 %v471
    %v479 = vmul.f32 %v478, %v476
    %v480 = vxor.u32 %v479, 2147483648
    %v481 = vsel %vm398, %v480, %v479
    %v482 = vsub.s32 4, %v458
    %v483 = vsel %vm398, %v482, %v458
    %v484 = vsel %vm397, %v188, %v481
    %v485 = vsel %vm397, 0, %v483
    %v486 = vcosq.f32.pop %v484
    %v487 = vsinq.f32.pop %v484
    %vm488 = vweird.f32 %v188
    %v489 = vand.u32 %v485, 3
    %vm490 = vcmp.lt.s32.totalorder %v489, 2
    %vm491 = vcmp.eq.s32.totalorder %v489, 0
    %v492 = vxor.u32 %v487, 2147483648
    %v493 = vsel %vm491, %v486, %v492
    %vm494 = vcmp.eq.s32.totalorder %v489, 2
    %v495 = vxor.u32 %v486, 2147483648
    %v496 = vsel %vm494, %v495, %v487
    %v497 = vsel %vm490, %v493, %v496
    %v498 = vsel %vm488, nan, %v497
    %v499 = vand.u32 2147483647, %v189
    %vm500 = vcmp.le.f32.partialorder %v499, 0.7853982
    %vm501 = vcmp.lt.s32.totalorder %v189, 0
    %v502 = vand.u32 %v189, 2139095040
    %v503 = vshrl.u32 %v502, 23
    %v504 = vsub.s32 %v503, 127
    %v505 = vand.u32 2147483647, %v189
    %v506 = vand.u32 %v505, 8388607
    %v507 = vor.u32 %v506, 8388608
    %v508 = vsub.s32 0, %v507
    %v509 = vadd.s32 %v504, 1
    %vm510 = vcmp.gt.s32.totalorder %v509, 0
    %v511 = vsel %vm510, %v509, 0
    %v512 = vshrl.u32 %v511, 5
    %v513 = vand.u32 %v511, 31
    %v514 = vsub.s32 32, %v513
    %v515 = vshrl.u32 683565275, %v514
    %v516 = vshll.u32 683565275, %v513
    %v517 = vshrl.u32 2475754826, %v514
    %v518 = vor.u32 %v516, %v517
    %v519 = vshll.u32 2475754826, %v513
    %v520 = vshrl.u32 2131351028, %v514
    %v521 = vor.u32 %v519, %v520
    %v522 = vshll.u32 2131351028, %v513
    %v523 = vshrl.u32 2102212464, %v514
    %v524 = vor.u32 %v522, %v523
    %v525 = vshll.u32 2102212464, %v513
    %v526 = vshrl.u32 920167782, %v514
    %v527 = vor.u32 %v525, %v526
    %v528 = vshll.u32 920167782, %v513
    %v529 = vshrl.u32 1326507024, %v514
    %v530 = vor.u32 %v528, %v529
    %vm531 = vcmp.lt.s32.totalorder %v512, 1
    %vm532 = vcmp.lt.s32.totalorder %v512, 2
    %vm533 = vcmp.lt.s32.totalorder %v512, 3
    %vm534 = vcmp.lt.s32.totalorder %v512, 4
    %v535 = vsel %vm531, %v515, %v518
    %v536 = vsel %vm534, %v524, 2102212464
    %v537 = vsel %vm533, %v521, %v536
    %v538 = vsel %vm532, %v535, %v537
    %v539 = vsel %vm531, %v518, %v521
    %v540 = vsel %vm534, %v527, 920167782
    %v541 = vsel %vm533, %v524, %v540
    %v542 = vsel %vm532, %v539, %v541
    %v543 = vsel %vm531, %v521, %v524
    %v544 = vsel %vm534, %v530, 1326507024
    %v545 = vsel %vm533, %v527, %v544
    %v546 = vsel %vm532, %v543, %v545
    %v547 = vshll.u32 %v507, 8
    %v548 = vmul.u32.u64.compose %v547, %v546
    %v549 = vextract.low.u32 %v548
    %v550 = vextract.high.u32 %v548
    %v551 = vmul.u32.u64.compose %v547, %v542
    %v552 = vextract.low.u32 %v551
    %v553 = vextract.high.u32 %v551
    %v554 = vmul.u32 %v547, %v538
    %v555 = vadd.s32 %v550, %v552
    %vm556 = vc.u32 %v550, %v552
    %v557 = vadd.s32 %v553, 1
    %v558 = vsel %vm556, %v557, %v553
    %v559 = vadd.s32 %v554, %v558
    %v560 = vadd.s32 %v559, 536870912
    %v561 = vshrl.u32 %v560, 30
    %v562 = vshll.u32 %v561, 30
    %v563 = vsub.s32 %v559, %v562
    %vm564 = vcmp.lt.s32.totalorder %v563, 0
    %v565 = vsub.s32 0, %v563
    %v566 = vsel %vm564, %v565, %v563
    %v567 = vclz %v566
    %v568 = vsub.s32 %v567, 2
    %vm569 = vcmp.gt.s32.totalorder 0, %v568
    %v570 = vsel %vm569, 0, %v568
    %v571 = vsub.s32 32, %v570
    %v572 = vshll.u32 %v563, %v570
    %v573 = vshrl.u32 %v555, %v571
    %v574 = vor.u32 %v572, %v573
    %v575 = vsub.s32 4294967266, %v570
    %v576 = vadd.s32 %v575, 127
    %v577 = vshll.u32 %v576, 23
    %v578 = vor.u32 4788187, %v577
    %v579 = vand.u32 2147483647, %v578
    %v581 = vcvt.s32.f32 %v574
    %v582 = vmul.f32 %v581, %v579
    %v583 = vxor.u32 %v582, 2147483648
    %v584 = vsel %vm501, %v583, %v582
    %v585 = vsub.s32 4, %v561
    %v586 = vsel %vm501, %v585, %v561
    %v587 = vsel %vm500, %v189, %v584
    %v588 = vsel %vm500, 0, %v586
    %v589 = vcosq.f32.pop %v587
    %v590 = vsinq.f32.pop %v587
    %vm591 = vweird.f32 %v189
    %v592 = vand.u32 %v588, 3
    %vm593 = vcmp.lt.s32.totalorder %v592, 2
    %vm594 = vcmp.eq.s32.totalorder %v592, 0
    %v595 = vxor.u32 %v590, 2147483648
    %v596 = vsel %vm594, %v589, %v595
    %vm597 = vcmp.eq.s32.totalorder %v592, 2
    %v598 = vxor.u32 %v589, 2147483648
    %v599 = vsel %vm597, %v598, %v590
    %v600 = vsel %vm593, %v596, %v599
    %v601 = vsel %vm591, nan, %v600
    %v602 = vmul.f32 %v164, %v292
    %v603 = vmul.f32 %v171, %v395
    %v604 = vmul.f32 %v178, %v498
    %v605 = vmul.f32 %v185, %v601
    %v606 = vand.u32 2147483647, %v186
    %vm607 = vcmp.le.f32.partialorder %v606, 0.7853982
    %vm608 = vcmp.lt.s32.totalorder %v186, 0
    %v609 = vand.u32 %v186, 2139095040
    %v610 = vshrl.u32 %v609, 23
    %v611 = vsub.s32 %v610, 127
    %v612 = vand.u32 2147483647, %v186
    %v613 = vand.u32 %v612, 8388607
    %v614 = vor.u32 %v613, 8388608
    %v615 = vsub.s32 0, %v614
    %v616 = vadd.s32 %v611, 1
    %vm617 = vcmp.gt.s32.totalorder %v616, 0
    %v618 = vsel %vm617, %v616, 0
    %v619 = vshrl.u32 %v618, 5
    %v620 = vand.u32 %v618, 31
    %v621 = vsub.s32 32, %v620
    %v622 = vshrl.u32 683565275, %v621
    %v623 = vshll.u32 683565275, %v620
    %v624 = vshrl.u32 2475754826, %v621
    %v625 = vor.u32 %v623, %v624
    %v626 = vshll.u32 2475754826, %v620
    %v627 = vshrl.u32 2131351028, %v621
    %v628 = vor.u32 %v626, %v627
    %v629 = vshll.u32 2131351028, %v620
    %v630 = vshrl.u32 2102212464, %v621
    %v631 = vor.u32 %v629, %v630
    %v632 = vshll.u32 2102212464, %v620
    %v633 = vshrl.u32 920167782, %v621
    %v634 = vor.u32 %v632, %v633
    %v635 = vshll.u32 920167782, %v620
    %v636 = vshrl.u32 1326507024, %v621
    %v637 = vor.u32 %v635, %v636
    %vm638 = vcmp.lt.s32.totalorder %v619, 1
    %vm639 = vcmp.lt.s32.totalorder %v619, 2
    %vm640 = vcmp.lt.s32.totalorder %v619, 3
    %vm641 = vcmp.lt.s32.totalorder %v619, 4
    %v642 = vsel %vm638, %v622, %v625
    %v643 = vsel %vm641, %v631, 2102212464
    %v644 = vsel %vm640, %v628, %v643
    %v645 = vsel %vm639, %v642, %v644
    %v646 = vsel %vm638, %v625, %v628
    %v647 = vsel %vm641, %v634, 920167782
    %v648 = vsel %vm640, %v631, %v647
    %v649 = vsel %vm639, %v646, %v648
    %v650 = vsel %vm638, %v628, %v631
    %v651 = vsel %vm641, %v637, 1326507024
    %v652 = vsel %vm640, %v634, %v651
    %v653 = vsel %vm639, %v650, %v652
    %v654 = vshll.u32 %v614, 8
    %v655 = vmul.u32.u64.compose %v654, %v653
    %v656 = vextract.low.u32 %v655
    %v657 = vextract.high.u32 %v655
    %v658 = vmul.u32.u64.compose %v654, %v649
    %v659 = vextract.low.u32 %v658
    %v660 = vextract.high.u32 %v658
    %v661 = vmul.u32 %v654, %v645
    %v662 = vadd.s32 %v657, %v659
    %vm663 = vc.u32 %v657, %v659
    %v664 = vadd.s32 %v660, 1
    %v665 = vsel %vm663, %v664, %v660
    %v666 = vadd.s32 %v661, %v665
    %v667 = vadd.s32 %v666, 536870912
    %v668 = vshrl.u32 %v667, 30
    %v669 = vshll.u32 %v668, 30
    %v670 = vsub.s32 %v666, %v669
    %vm671 = vcmp.lt.s32.totalorder %v670, 0
    %v672 = vsub.s32 0, %v670
    %v673 = vsel %vm671, %v672, %v670
    %v674 = vclz %v673
    %v675 = vsub.s32 %v674, 2
    %vm676 = vcmp.gt.s32.totalorder 0, %v675
    %v677 = vsel %vm676, 0, %v675
    %v678 = vsub.s32 32, %v677
    %v679 = vshll.u32 %v670, %v677
    %v680 = vshrl.u32 %v662, %v678
    %v681 = vor.u32 %v679, %v680
    %v682 = vsub.s32 4294967266, %v677
    %v683 = vadd.s32 %v682, 127
    %v684 = vshll.u32 %v683, 23
    %v685 = vor.u32 4788187, %v684
    %v686 = vand.u32 2147483647, %v685
    %v688 = vcvt.s32.f32 %v681
    %v689 = vmul.f32 %v688, %v686
    %v690 = vxor.u32 %v689, 2147483648
    %v691 = vsel %vm608, %v690, %v689
    %v692 = vsub.s32 4, %v668
    %v693 = vsel %vm608, %v692, %v668
    %v694 = vsel %vm607, %v186, %v691
    %v695 = vsel %vm607, 0, %v693
    %v696 = vcosq.f32.pop %v694
    %v697 = vsinq.f32.pop %v694
    %vm698 = vweird.f32 %v186
    %v699 = vadd.s32 %v695, 3
    %v700 = vand.u32 %v699, 3
    %vm701 = vcmp.lt.s32.totalorder %v700, 2
    %vm702 = vcmp.eq.s32.totalorder %v700, 0
    %v703 = vxor.u32 %v697, 2147483648
    %v704 = vsel %vm702, %v696, %v703
    %vm705 = vcmp.eq.s32.totalorder %v700, 2
    %v706 = vxor.u32 %v696, 2147483648
    %v707 = vsel %vm705, %v706, %v697
    %v708 = vsel %vm701, %v704, %v707
    %v709 = vsel %vm698, nan, %v708
    %v710 = vand.u32 2147483647, %v187
    %vm711 = vcmp.le.f32.partialorder %v710, 0.7853982
    %vm712 = vcmp.lt.s32.totalorder %v187, 0
    %v713 = vand.u32 %v187, 2139095040
    %v714 = vshrl.u32 %v713, 23
    %v715 = vsub.s32 %v714, 127
    %v716 = vand.u32 2147483647, %v187
    %v717 = vand.u32 %v716, 8388607
    %v718 = vor.u32 %v717, 8388608
    %v719 = vsub.s32 0, %v718
    %v720 = vadd.s32 %v715, 1
    %vm721 = vcmp.gt.s32.totalorder %v720, 0
    %v722 = vsel %vm721, %v720, 0
    %v723 = vshrl.u32 %v722, 5
    %v724 = vand.u32 %v722, 31
    %v725 = vsub.s32 32, %v724
    %v726 = vshrl.u32 683565275, %v725
    %v727 = vshll.u32 683565275, %v724
    %v728 = vshrl.u32 2475754826, %v725
    %v729 = vor.u32 %v727, %v728
    %v730 = vshll.u32 2475754826, %v724
    %v731 = vshrl.u32 2131351028, %v725
    %v732 = vor.u32 %v730, %v731
    %v733 = vshll.u32 2131351028, %v724
    %v734 = vshrl.u32 2102212464, %v725
    %v735 = vor.u32 %v733, %v734
    %v736 = vshll.u32 2102212464, %v724
    %v737 = vshrl.u32 920167782, %v725
    %v738 = vor.u32 %v736, %v737
    %v739 = vshll.u32 920167782, %v724
    %v740 = vshrl.u32 1326507024, %v725
    %v741 = vor.u32 %v739, %v740
    %vm742 = vcmp.lt.s32.totalorder %v723, 1
    %vm743 = vcmp.lt.s32.totalorder %v723, 2
    %vm744 = vcmp.lt.s32.totalorder %v723, 3
    %vm745 = vcmp.lt.s32.totalorder %v723, 4
    %v746 = vsel %vm742, %v726, %v729
    %v747 = vsel %vm745, %v735, 2102212464
    %v748 = vsel %vm744, %v732, %v747
    %v749 = vsel %vm743, %v746, %v748
    %v750 = vsel %vm742, %v729, %v732
    %v751 = vsel %vm745, %v738, 920167782
    %v752 = vsel %vm744, %v735, %v751
    %v753 = vsel %vm743, %v750, %v752
    %v754 = vsel %vm742, %v732, %v735
    %v755 = vsel %vm745, %v741, 1326507024
    %v756 = vsel %vm744, %v738, %v755
    %v757 = vsel %vm743, %v754, %v756
    %v758 = vshll.u32 %v718, 8
    %v759 = vmul.u32.u64.compose %v758, %v757
    %v760 = vextract.low.u32 %v759
    %v761 = vextract.high.u32 %v759
    %v762 = vmul.u32.u64.compose %v758, %v753
    %v763 = vextract.low.u32 %v762
    %v764 = vextract.high.u32 %v762
    %v765 = vmul.u32 %v758, %v749
    %v766 = vadd.s32 %v761, %v763
    %vm767 = vc.u32 %v761, %v763
    %v768 = vadd.s32 %v764, 1
    %v769 = vsel %vm767, %v768, %v764
    %v770 = vadd.s32 %v765, %v769
    %v771 = vadd.s32 %v770, 536870912
    %v772 = vshrl.u32 %v771, 30
    %v773 = vshll.u32 %v772, 30
    %v774 = vsub.s32 %v770, %v773
    %vm775 = vcmp.lt.s32.totalorder %v774, 0
    %v776 = vsub.s32 0, %v774
    %v777 = vsel %vm775, %v776, %v774
    %v778 = vclz %v777
    %v779 = vsub.s32 %v778, 2
    %vm780 = vcmp.gt.s32.totalorder 0, %v779
    %v781 = vsel %vm780, 0, %v779
    %v782 = vsub.s32 32, %v781
    %v783 = vshll.u32 %v774, %v781
    %v784 = vshrl.u32 %v766, %v782
    %v785 = vor.u32 %v783, %v784
    %v786 = vsub.s32 4294967266, %v781
    %v787 = vadd.s32 %v786, 127
    %v788 = vshll.u32 %v787, 23
    %v789 = vor.u32 4788187, %v788
    %v790 = vand.u32 2147483647, %v789
    %v792 = vcvt.s32.f32 %v785
    %v793 = vmul.f32 %v792, %v790
    %v794 = vxor.u32 %v793, 2147483648
    %v795 = vsel %vm712, %v794, %v793
    %v796 = vsub.s32 4, %v772
    %v797 = vsel %vm712, %v796, %v772
    %v798 = vsel %vm711, %v187, %v795
    %v799 = vsel %vm711, 0, %v797
    %v800 = vcosq.f32.pop %v798
    %v801 = vsinq.f32.pop %v798
    %vm802 = vweird.f32 %v187
    %v803 = vadd.s32 %v799, 3
    %v804 = vand.u32 %v803, 3
    %vm805 = vcmp.lt.s32.totalorder %v804, 2
    %vm806 = vcmp.eq.s32.totalorder %v804, 0
    %v807 = vxor.u32 %v801, 2147483648
    %v808 = vsel %vm806, %v800, %v807
    %vm809 = vcmp.eq.s32.totalorder %v804, 2
    %v810 = vxor.u32 %v800, 2147483648
    %v811 = vsel %vm809, %v810, %v801
    %v812 = vsel %vm805, %v808, %v811
    %v813 = vsel %vm802, nan, %v812
    %v814 = vand.u32 2147483647, %v188
    %vm815 = vcmp.le.f32.partialorder %v814, 0.7853982
    %vm816 = vcmp.lt.s32.totalorder %v188, 0
    %v817 = vand.u32 %v188, 2139095040
    %v818 = vshrl.u32 %v817, 23
    %v819 = vsub.s32 %v818, 127
    %v820 = vand.u32 2147483647, %v188
    %v821 = vand.u32 %v820, 8388607
    %v822 = vor.u32 %v821, 8388608
    %v823 = vsub.s32 0, %v822
    %v824 = vadd.s32 %v819, 1
    %vm825 = vcmp.gt.s32.totalorder %v824, 0
    %v826 = vsel %vm825, %v824, 0
    %v827 = vshrl.u32 %v826, 5
    %v828 = vand.u32 %v826, 31
    %v829 = vsub.s32 32, %v828
    %v830 = vshrl.u32 683565275, %v829
    %v831 = vshll.u32 683565275, %v828
    %v832 = vshrl.u32 2475754826, %v829
    %v833 = vor.u32 %v831, %v832
    %v834 = vshll.u32 2475754826, %v828
    %v835 = vshrl.u32 2131351028, %v829
    %v836 = vor.u32 %v834, %v835
    %v837 = vshll.u32 2131351028, %v828
    %v838 = vshrl.u32 2102212464, %v829
    %v839 = vor.u32 %v837, %v838
    %v840 = vshll.u32 2102212464, %v828
    %v841 = vshrl.u32 920167782, %v829
    %v842 = vor.u32 %v840, %v841
    %v843 = vshll.u32 920167782, %v828
    %v844 = vshrl.u32 1326507024, %v829
    %v845 = vor.u32 %v843, %v844
    %vm846 = vcmp.lt.s32.totalorder %v827, 1
    %vm847 = vcmp.lt.s32.totalorder %v827, 2
    %vm848 = vcmp.lt.s32.totalorder %v827, 3
    %vm849 = vcmp.lt.s32.totalorder %v827, 4
    %v850 = vsel %vm846, %v830, %v833
    %v851 = vsel %vm849, %v839, 2102212464
    %v852 = vsel %vm848, %v836, %v851
    %v853 = vsel %vm847, %v850, %v852
    %v854 = vsel %vm846, %v833, %v836
    %v855 = vsel %vm849, %v842, 920167782
    %v856 = vsel %vm848, %v839, %v855
    %v857 = vsel %vm847, %v854, %v856
    %v858 = vsel %vm846, %v836, %v839
    %v859 = vsel %vm849, %v845, 1326507024
    %v860 = vsel %vm848, %v842, %v859
    %v861 = vsel %vm847, %v858, %v860
    %v862 = vshll.u32 %v822, 8
    %v863 = vmul.u32.u64.compose %v862, %v861
    %v864 = vextract.low.u32 %v863
    %v865 = vextract.high.u32 %v863
    %v866 = vmul.u32.u64.compose %v862, %v857
    %v867 = vextract.low.u32 %v866
    %v868 = vextract.high.u32 %v866
    %v869 = vmul.u32 %v862, %v853
    %v870 = vadd.s32 %v865, %v867
    %vm871 = vc.u32 %v865, %v867
    %v872 = vadd.s32 %v868, 1
    %v873 = vsel %vm871, %v872, %v868
    %v874 = vadd.s32 %v869, %v873
    %v875 = vadd.s32 %v874, 536870912
    %v876 = vshrl.u32 %v875, 30
    %v877 = vshll.u32 %v876, 30
    %v878 = vsub.s32 %v874, %v877
    %vm879 = vcmp.lt.s32.totalorder %v878, 0
    %v880 = vsub.s32 0, %v878
    %v881 = vsel %vm879, %v880, %v878
    %v882 = vclz %v881
    %v883 = vsub.s32 %v882, 2
    %vm884 = vcmp.gt.s32.totalorder 0, %v883
    %v885 = vsel %vm884, 0, %v883
    %v886 = vsub.s32 32, %v885
    %v887 = vshll.u32 %v878, %v885
    %v888 = vshrl.u32 %v870, %v886
    %v889 = vor.u32 %v887, %v888
    %v890 = vsub.s32 4294967266, %v885
    %v891 = vadd.s32 %v890, 127
    %v892 = vshll.u32 %v891, 23
    %v893 = vor.u32 4788187, %v892
    %v894 = vand.u32 2147483647, %v893
    %v896 = vcvt.s32.f32 %v889
    %v897 = vmul.f32 %v896, %v894
    %v898 = vxor.u32 %v897, 2147483648
    %v899 = vsel %vm816, %v898, %v897
    %v900 = vsub.s32 4, %v876
    %v901 = vsel %vm816, %v900, %v876
    %v902 = vsel %vm815, %v188, %v899
    %v903 = vsel %vm815, 0, %v901
    %v904 = vcosq.f32.pop %v902
    %v905 = vsinq.f32.pop %v902
    %vm906 = vweird.f32 %v188
    %v907 = vadd.s32 %v903, 3
    %v908 = vand.u32 %v907, 3
    %vm909 = vcmp.lt.s32.totalorder %v908, 2
    %vm910 = vcmp.eq.s32.totalorder %v908, 0
    %v911 = vxor.u32 %v905, 2147483648
    %v912 = vsel %vm910, %v904, %v911
    %vm913 = vcmp.eq.s32.totalorder %v908, 2
    %v914 = vxor.u32 %v904, 2147483648
    %v915 = vsel %vm913, %v914, %v905
    %v916 = vsel %vm909, %v912, %v915
    %v917 = vsel %vm906, nan, %v916
    %v918 = vand.u32 2147483647, %v189
    %vm919 = vcmp.le.f32.partialorder %v918, 0.7853982
    %vm920 = vcmp.lt.s32.totalorder %v189, 0
    %v921 = vand.u32 %v189, 2139095040
    %v922 = vshrl.u32 %v921, 23
    %v923 = vsub.s32 %v922, 127
    %v924 = vand.u32 2147483647, %v189
    %v925 = vand.u32 %v924, 8388607
    %v926 = vor.u32 %v925, 8388608
    %v927 = vsub.s32 0, %v926
    %v928 = vadd.s32 %v923, 1
    %vm929 = vcmp.gt.s32.totalorder %v928, 0
    %v930 = vsel %vm929, %v928, 0
    %v931 = vshrl.u32 %v930, 5
    %v932 = vand.u32 %v930, 31
    %v933 = vsub.s32 32, %v932
    %v934 = vshrl.u32 683565275, %v933
    %v935 = vshll.u32 683565275, %v932
    %v936 = vshrl.u32 2475754826, %v933
    %v937 = vor.u32 %v935, %v936
    %v938 = vshll.u32 2475754826, %v932
    %v939 = vshrl.u32 2131351028, %v933
    %v940 = vor.u32 %v938, %v939
    %v941 = vshll.u32 2131351028, %v932
    %v942 = vshrl.u32 2102212464, %v933
    %v943 = vor.u32 %v941, %v942
    %v944 = vshll.u32 2102212464, %v932
    %v945 = vshrl.u32 920167782, %v933
    %v946 = vor.u32 %v944, %v945
    %v947 = vshll.u32 920167782, %v932
    %v948 = vshrl.u32 1326507024, %v933
    %v949 = vor.u32 %v947, %v948
    %vm950 = vcmp.lt.s32.totalorder %v931, 1
    %vm951 = vcmp.lt.s32.totalorder %v931, 2
    %vm952 = vcmp.lt.s32.totalorder %v931, 3
    %vm953 = vcmp.lt.s32.totalorder %v931, 4
    %v954 = vsel %vm950, %v934, %v937
    %v955 = vsel %vm953, %v943, 2102212464
    %v956 = vsel %vm952, %v940, %v955
    %v957 = vsel %vm951, %v954, %v956
    %v958 = vsel %vm950, %v937, %v940
    %v959 = vsel %vm953, %v946, 920167782
    %v960 = vsel %vm952, %v943, %v959
    %v961 = vsel %vm951, %v958, %v960
    %v962 = vsel %vm950, %v940, %v943
    %v963 = vsel %vm953, %v949, 1326507024
    %v964 = vsel %vm952, %v946, %v963
    %v965 = vsel %vm951, %v962, %v964
    %v966 = vshll.u32 %v926, 8
    %v967 = vmul.u32.u64.compose %v966, %v965
    %v968 = vextract.low.u32 %v967
    %v969 = vextract.high.u32 %v967
    %v970 = vmul.u32.u64.compose %v966, %v961
    %v971 = vextract.low.u32 %v970
    %v972 = vextract.high.u32 %v970
    %v973 = vmul.u32 %v966, %v957
    %v974 = vadd.s32 %v969, %v971
    %vm975 = vc.u32 %v969, %v971
    %v976 = vadd.s32 %v972, 1
    %v977 = vsel %vm975, %v976, %v972
    %v978 = vadd.s32 %v973, %v977
    %v979 = vadd.s32 %v978, 536870912
    %v980 = vshrl.u32 %v979, 30
    %v981 = vshll.u32 %v980, 30
    %v982 = vsub.s32 %v978, %v981
    %vm983 = vcmp.lt.s32.totalorder %v982, 0
    %v984 = vsub.s32 0, %v982
    %v985 = vsel %vm983, %v984, %v982
    %v986 = vclz %v985
    %v987 = vsub.s32 %v986, 2
    %vm988 = vcmp.gt.s32.totalorder 0, %v987
    %v989 = vsel %vm988, 0, %v987
    %v990 = vsub.s32 32, %v989
    %v991 = vshll.u32 %v982, %v989
    %v992 = vshrl.u32 %v974, %v990
    %v993 = vor.u32 %v991, %v992
    %v994 = vsub.s32 4294967266, %v989
    %v995 = vadd.s32 %v994, 127
    %v996 = vshll.u32 %v995, 23
    %v997 = vor.u32 4788187, %v996
    %v998 = vand.u32 2147483647, %v997
    %v1000 = vcvt.s32.f32 %v993
    %v1001 = vmul.f32 %v1000, %v998
    %v1002 = vxor.u32 %v1001, 2147483648
    %v1003 = vsel %vm920, %v1002, %v1001
    %v1004 = vsub.s32 4, %v980
    %v1005 = vsel %vm920, %v1004, %v980
    %v1006 = vsel %vm919, %v189, %v1003
    %v1007 = vsel %vm919, 0, %v1005
    %v1008 = vcosq.f32.pop %v1006
    %v1009 = vsinq.f32.pop %v1006
    %vm1010 = vweird.f32 %v189
    %v1011 = vadd.s32 %v1007, 3
    %v1012 = vand.u32 %v1011, 3
    %vm1013 = vcmp.lt.s32.totalorder %v1012, 2
    %vm1014 = vcmp.eq.s32.totalorder %v1012, 0
    %v1015 = vxor.u32 %v1009, 2147483648
    %v1016 = vsel %vm1014, %v1008, %v1015
    %vm1017 = vcmp.eq.s32.totalorder %v1012, 2
    %v1018 = vxor.u32 %v1008, 2147483648
    %v1019 = vsel %vm1017, %v1018, %v1009
    %v1020 = vsel %vm1013, %v1016, %v1019
    %v1021 = vsel %vm1010, nan, %v1020
    %v1022 = vmul.f32 %v164, %v709
    %v1023 = vmul.f32 %v171, %v813
    %v1024 = vmul.f32 %v178, %v917
    %v1025 = vmul.f32 %v185, %v1021
    %v1026 = vmul.f32 %v602, 2.0
    %v1027 = vmul.f32 %v603, 2.0
    %v1028 = vmul.f32 %v604, 2.0
    %v1029 = vmul.f32 %v605, 2.0
    %v1030 = vmul.f32 %v1022, 2.0
    %v1031 = vmul.f32 %v1023, 2.0
    %v1032 = vmul.f32 %v1024, 2.0
    %v1033 = vmul.f32 %v1025, 2.0
    %v1034 = vadd.f32 %v1026, 0.5
    %v1035 = vadd.f32 %v1027, 0.5
    %v1036 = vadd.f32 %v1028, 0.5
    %v1037 = vadd.f32 %v1029, 0.5
    %v1038 = vadd.f32 %v1030, 0.5
    %v1039 = vadd.f32 %v1031, 0.5
    %v1040 = vadd.f32 %v1032, 0.5
    %v1041 = vadd.f32 %v1033, 0.5
    %v1042 = vld [vmem:[#allocation3] sm:$0xff]
    %v1043 = vld [vmem:[#allocation3 + $0x8] sm:$0xff]
    %v1052 = vcombine.low %v1034, %v1035
    %v1053 = vcombine.low %v1036, %v1037
    %v1055 = vunpack.c.l.s4 1983009808
    %v1056 = vunpack.c.0.s8 %v1055
    %v1057 = vlaneseq
    %v1058 = vshrl.u32 %v1057, 7
    %v1059 = vsub.s32 %v1056, %v1058
    %v1060 = vrot.slane %v1052, %v1059
    %v1062 = vunpack.c.l.s4 1983009808
    %v1063 = vunpack.c.0.s8 %v1062
    %v1064 = vlaneseq
    %v1065 = vshrl.u32 %v1064, 7
    %v1066 = vsub.s32 %v1063, %v1065
    %v1067 = vrot.slane %v1053, %v1066
    %v1068 = vcombine.low %v1060, %v1067
    %v1069 = vcombine.low %v1038, %v1039
    %v1070 = vcombine.low %v1040, %v1041
    %v1072 = vunpack.c.l.s4 1983009808
    %v1073 = vunpack.c.0.s8 %v1072
    %v1074 = vlaneseq
    %v1075 = vshrl.u32 %v1074, 7
    %v1076 = vsub.s32 %v1073, %v1075
    %v1077 = vrot.slane %v1069, %v1076
    %v1079 = vunpack.c.l.s4 1983009808
    %v1080 = vunpack.c.0.s8 %v1079
    %v1081 = vlaneseq
    %v1082 = vshrl.u32 %v1081, 7
    %v1083 = vsub.s32 %v1080, %v1082
    %v1084 = vrot.slane %v1070, %v1083
    %v1085 = vcombine.low %v1077, %v1084
    %v1088 = vadd.f32 %v1042, %v1068
    %v1089 = vadd.f32 %v1043, %v1085
    %1090 = vst [vmem:[#allocation6] sm:$0xff] %v1088
    %1091 = vst [vmem:[#allocation6 + $0x8] sm:$0xff] %v1089
    // Predicated region
    $region14: #{tpu_custom_call.1} parent=1 // pred_check
      _
    $region15: #{tpu_custom_call.1} parent=1 // pred_check_branch
      %1093 = sbr.rel (0) target = $region17
    $region16: #{tpu_custom_call.1} parent=1 // pred_region
      %s1095 = ssub.s32 256, 256
      %1096 = vsyncadd [#allocation5], %s1095
      %s1098 = sshll.u32 [#allocation6], 4
      %s1099 = int_to_ptr.vmem [resolvable:$true] %s1098
      %1101 = dma.vmem_to_hbm [thread:$0]  %s1099, 256, %s2, [#allocation5]
    $region17: #{tpu_custom_call.1} parent=1 // pred_fallthru
      _
    // Predicated region
    $region18: #{tpu_custom_call.1} parent=1 // pred_check
      _
    $region19: #{tpu_custom_call.1} parent=1 // pred_check_branch
      %1103 = sbr.rel (0) target = $region21
    $region20: #{tpu_custom_call.1} parent=1 // pred_region
      %1104 = dma.done [#allocation5], 256
    $region21: #{tpu_custom_call.1} parent=1 // pred_fallthru
      _
    %1105 = vsyncpa [#allocation4], 1
    %1106 = vsyncpa [#allocation5], 1

</llo_original>
